<compile_context>
chip_gen: v5e
topology: v5e:2x2
jax: 0.10.0
libtpu: 0.0.40
codegen_flags: <defaults>
</compile_context>

<pallas_src>
import jax
import jax.numpy as jnp
from jax import lax
from jax.experimental import pallas as pl
from jax.experimental.pallas import tpu as pltpu


def hidden_lstm_kernel(x_ref, wih_ref, whh_ref, b_ref, wfc_ref, bfc_ref,
                       out_ref, pg_ref):
    Bt, T, Din = x_ref.shape
    H = whh_ref.shape[0]          # whh is (H, 4H)
    G = 4 * H

    # ---- preprocess: (x - mean) / (std + 1e-8), stats over time (dim=1),
    #      unbiased std (torch.Tensor.std default; NaN for T==1, like torch) ----
    x = x_ref[...].astype(jnp.float32)
    mean = jnp.mean(x, axis=1, keepdims=True)                        # (Bt, 1, Din)
    var = jnp.sum((x - mean) ** 2, axis=1, keepdims=True) / (T - 1)
    inv = 1.0 / (jnp.sqrt(var) + 1e-8)                               # (Bt, 1, Din)

    wih = wih_ref[...].astype(jnp.bfloat16)                          # (Din, 4H)
    bias = b_ref[...]                                                # (1, 4H) f32

    # ---- hoisted input projection: time-major transpose of the (small,
    #      Din-lane) normalized input BEFORE the matmul, staged in T-chunks so
    #      the live (CH*Bt, 4H) f32 intermediate stays bounded; stored bf16 ----
    rows_target = 512                              # rows per staging matmul
    CH = 1
    for d in range(min(T, max(1, rows_target // Bt)), 0, -1):
        if T % d == 0:
            CH = d
            break
    for t0 in range(0, T, CH):                     # static chunk loop (T compile-time)
        xn_c = (x_ref[:, t0:t0 + CH, :].astype(jnp.float32) - mean) * inv
        xn_tm = jnp.transpose(xn_c, (1, 0, 2)).reshape(CH * Bt, Din)
        pre = (jnp.dot(xn_tm.astype(jnp.bfloat16), wih,
                       preferred_element_type=jnp.float32) + bias)   # (CH*Bt, 4H)
        pg_ref[t0:t0 + CH] = pre.reshape(CH, Bt, G).astype(jnp.bfloat16)

    whh = whh_ref[...].astype(jnp.bfloat16)        # held bf16 for the MXU
    # TODO(synk): at scale, keep W_hh resident in MXU weight registers across
    # steps via pltpu.matmul_push_rhs / matmul_acc_lhs / matmul_pop.

    # ---- LSTM recurrence; gate columns were permuted to [i, f, o, g] on the
    #      host so sigmoid covers a contiguous 3H block and tanh only H.
    #      h / c stay in vregs across the fori_loop (no per-step VMEM state). ----
    def step(t, carry):
        h, c = carry
        gates = pg_ref[t] + jnp.dot(h.astype(jnp.bfloat16), whh,
                                    preferred_element_type=jnp.float32)  # (Bt, 4H) f32
        sig = jax.nn.sigmoid(gates[:, :3 * H])     # i, f, o   (one EUP pass over 3H)
        g_g = jnp.tanh(gates[:, 3 * H:])           # g         (one EUP pass over  H)
        i_g = sig[:, :H]
        f_g = sig[:, H:2 * H]
        o_g = sig[:, 2 * H:]
        c = f_g * c + i_g * g_g
        h = o_g * jnp.tanh(c)
        return h, c

    h0 = jnp.zeros((Bt, H), jnp.float32)
    c0 = jnp.zeros((Bt, H), jnp.float32)
    h, _ = lax.fori_loop(0, T, step, (h0, c0), unroll=min(8, T))

    # ---- fc(output[:, -1, :]); dropout_layer is identity in eval mode.
    #      wfc/bfc are pre-padded to a 128-lane multiple -> lane-dense store. ----
    out_ref[...] = (jnp.dot(h.astype(jnp.bfloat16),
                            wfc_ref[...].astype(jnp.bfloat16),
                            preferred_element_type=jnp.float32) + bfc_ref[...])


def _reorder_gates_ifgo_to_ifog(m, H):
    # PyTorch LSTM packs the 4H axis as [i | f | g | o]; the kernel wants
    # [i | f | o | g] so sigmoid(gates[:, :3H]) / tanh(gates[:, 3H:]) suffice.
    return jnp.concatenate([m[..., :2 * H], m[..., 3 * H:], m[..., 2 * H:3 * H]],
                           axis=-1)


def hidden_lstm_forward(x, wih, whh, b, wfc, bfc, *, block_b=None):
    B, T, Din = x.shape
    H = whh.shape[0]
    Dout = wfc.shape[1]
    Dout_pad = ((Dout + 127) // 128) * 128

    # Gate-column permutation (host-side, once).
    wih = _reorder_gates_ifgo_to_ifog(wih, H)
    whh = _reorder_gates_ifgo_to_ifog(whh, H)
    b = _reorder_gates_ifgo_to_ifog(b, H)

    # Zero-pad fc params so the kernel's output tile is lane-dense.
    if Dout_pad != Dout:
        wfc = jnp.pad(wfc, ((0, 0), (0, Dout_pad - Dout)))
        bfc = jnp.pad(bfc, ((0, 0), (0, Dout_pad - Dout)))

    # ---- batch-tile selection ------------------------------------------------
    # Per-tile VMEM: x tile (double-buffered f32) + bf16 pre-gate scratch +
    # output tile (double-buffered f32).
    def tile_bytes(bb):
        return (2 * bb * T * Din * 4
                + T * bb * 4 * H * 2
                + 2 * bb * Dout_pad * 4)

    TILE_BUDGET = 12 << 20      # headroom for weights + compiler temporaries
    if block_b is None:
        block_b = B
        divs8 = sorted((d for d in range(8, B, 8) if B % d == 0), reverse=True)
        if B >= 16:
            # Prefer >=2 batch tiles so the "parallel" axis can shard over v7x's
            # two TensorCores; keep tiles as large as the budget allows
            # (v5e/v6e are single-core: don't over-split).
            for bb in divs8:
                if bb <= B // 2 and tile_bytes(bb) <= TILE_BUDGET:
                    block_b = bb
                    break
        if block_b == B and tile_bytes(B) > TILE_BUDGET:
            for bb in divs8:
                if tile_bytes(bb) <= TILE_BUDGET:
                    block_b = bb
                    break
    assert B % block_b == 0 and (block_b == B or block_b % 8 == 0)
    grid = (B // block_b,)

    # Explicit scoped-VMEM limit from the computed footprint (weights are
    # double-buffered by the pipeline even with a constant block index), never
    # below the 32 MiB default and clamped to v7x's 64 MiB physical VMEM.
    weight_bytes = 2 * 4 * (Din * 4 * H + H * 4 * H + 4 * H + H * Dout_pad + Dout_pad)
    vmem_limit = int(min(64 << 20,
                         max(32 << 20,
                             1.5 * (weight_bytes + tile_bytes(block_b)) + (4 << 20))))

    out_padded = pl.pallas_call(
        hidden_lstm_kernel,
        out_shape=jax.ShapeDtypeStruct((B, Dout_pad), jnp.float32),
        grid=grid,
        in_specs=[
            pl.BlockSpec((block_b, T, Din), lambda i: (i, 0, 0)),   # x (batch tile)
            pl.BlockSpec((Din, 4 * H), lambda i: (0, 0)),           # W_ih^T  [i,f,o,g]
            pl.BlockSpec((H, 4 * H), lambda i: (0, 0)),             # W_hh^T  [i,f,o,g]
            pl.BlockSpec((1, 4 * H), lambda i: (0, 0)),             # b_ih + b_hh
            pl.BlockSpec((H, Dout_pad), lambda i: (0, 0)),          # fc.weight^T (padded)
            pl.BlockSpec((1, Dout_pad), lambda i: (0, 0)),          # fc.bias (padded)
        ],
        out_specs=pl.BlockSpec((block_b, Dout_pad), lambda i: (i, 0)),
        scratch_shapes=[
            pltpu.VMEM((T, block_b, 4 * H), jnp.bfloat16),  # hoisted pre-gates, time-major
        ],
        compiler_params=pltpu.CompilerParams(
            dimension_semantics=("parallel",),
            vmem_limit_bytes=vmem_limit),
    )(x, wih, whh, b, wfc, bfc)
    return out_padded[:, :Dout]


def reference_forward(x, wih, whh, b, wfc, bfc):
    # Pure-JAX f32 reference of the same forward (PyTorch gate order i, f, g, o).
    B, T, Din = x.shape
    H = whh.shape[0]
    mean = x.mean(axis=1, keepdims=True)
    std = x.std(axis=1, ddof=1, keepdims=True)
    xn = (x - mean) / (std + 1e-8)
    h = jnp.zeros((B, H), jnp.float32)
    c = jnp.zeros((B, H), jnp.float32)
    for t in range(T):
        g = xn[:, t, :] @ wih + h @ whh + b
        i = jax.nn.sigmoid(g[:, :H])
        f = jax.nn.sigmoid(g[:, H:2 * H])
        gg = jnp.tanh(g[:, 2 * H:3 * H])
        o = jax.nn.sigmoid(g[:, 3 * H:])
        c = f * c + i * gg
        h = o * jnp.tanh(c)
    return h @ wfc + bfc


if __name__ == "__main__":
    # Small shapes consistent with the module's forward:
    # config = {LSTM_INPUT_DIM: 32, LSTM_HIDDEN_DIM: 32, LSTM_OUTPUT_DIM: 32,
    #           LSTM_NUM_LAYERS: 1, LSTM_BIDIRECTIONAL: False}
    # NOTE: T == 1 would produce NaN from the unbiased std (divide by T-1),
    # exactly like torch.Tensor.std -- keep T >= 2.
    B, T, Din, H, Dout = 2, 8, 32, 32, 32

    key = jax.random.PRNGKey(0)
    kx, k1, k2, k3, k4, k5, k6 = jax.random.split(key, 7)

    x = jax.random.normal(kx, (B, T, Din), dtype=jnp.float32)

    # Deterministic parameter init (PyTorch-style uniform(-1/sqrt(H), 1/sqrt(H))).
    bound = 1.0 / jnp.sqrt(jnp.float32(H))
    wih = jax.random.uniform(k1, (Din, 4 * H), jnp.float32, -bound, bound)   # weight_ih_l0.T
    whh = jax.random.uniform(k2, (H, 4 * H), jnp.float32, -bound, bound)     # weight_hh_l0.T
    b_ih = jax.random.uniform(k3, (1, 4 * H), jnp.float32, -bound, bound)
    b_hh = jax.random.uniform(k4, (1, 4 * H), jnp.float32, -bound, bound)
    b = b_ih + b_hh
    wfc = jax.random.uniform(k5, (H, Dout), jnp.float32, -bound, bound)      # fc.weight.T
    bfc = jax.random.uniform(k6, (1, Dout), jnp.float32, -bound, bound)      # fc.bias

    # TODO(synk): attention branches / packed sequences (lengths) / training-mode
    # dropout are not exercised by the default config and are not implemented.
    out = hidden_lstm_forward(x, wih, whh, b, wfc, bfc)
    jax.block_until_ready(out)
    assert out.shape == (B, Dout)

    # Sanity check vs pure-JAX f32 reference. The kernel uses bf16 MXU operands
    # (f32 accumulation) and a bf16 pre-gate stage, so a small drift vs the f32
    # reference is expected; 5e-2 bounds it comfortably at these shapes
    # (typical max-abs error is ~1e-2).
    ref = reference_forward(x, wih, whh, b, wfc, bfc)
    max_err = float(jnp.max(jnp.abs(out - ref)))
    assert max_err < 5e-2, f"max abs error {max_err} too large"

    print("KERNEL_OK")
</pallas_src>

<mosaic_0001>
module attributes {stable_mosaic.version = 11 : i64} {
  func.func @hidden_lstm_kernel(%arg0: i32, %arg1: memref<2x8x32xf32, #tpu.memory_space<vmem>>, %arg2: memref<32x128xf32, #tpu.memory_space<vmem>>, %arg3: memref<32x128xf32, #tpu.memory_space<vmem>>, %arg4: memref<1x128xf32, #tpu.memory_space<vmem>>, %arg5: memref<32x128xf32, #tpu.memory_space<vmem>>, %arg6: memref<1x128xf32, #tpu.memory_space<vmem>>, %arg7: memref<2x128xf32, #tpu.memory_space<vmem>>, %arg8: memref<8x2x128xbf16, #tpu.memory_space<vmem>>) attributes {dimension_semantics = [#tpu.dimension_semantics<parallel>], iteration_bounds = array<i64: 1>, scalar_prefetch = 0 : i64, scratch_operands = 1 : i64, tpu.core_type = #tpu.core_type<tc>, window_params = [{transform_indices = @transform_0, window_bounds = array<i64: 2, 8, 32>}, {pipeline_mode = #tpu.pipeline_mode<synchronous>, transform_indices = @transform_1, window_bounds = array<i64: 32, 128>}, {pipeline_mode = #tpu.pipeline_mode<synchronous>, transform_indices = @transform_2, window_bounds = array<i64: 32, 128>}, {pipeline_mode = #tpu.pipeline_mode<synchronous>, transform_indices = @transform_3, window_bounds = array<i64: 1, 128>}, {pipeline_mode = #tpu.pipeline_mode<synchronous>, transform_indices = @transform_4, window_bounds = array<i64: 32, 128>}, {pipeline_mode = #tpu.pipeline_mode<synchronous>, transform_indices = @transform_5, window_bounds = array<i64: 1, 128>}, {transform_indices = @transform_6, window_bounds = array<i64: 2, 128>}]} {
    %c0 = arith.constant 0 : index
    %c0_0 = arith.constant 0 : index
    %c0_1 = arith.constant 0 : index
    %0 = vector.load %arg1[%c0, %c0_0, %c0_1] : memref<2x8x32xf32, #tpu.memory_space<vmem>>, vector<2x8x32xf32>
    %cst = arith.constant dense<0.000000e+00> : vector<2x32xf32>
    %1 = vector.multi_reduction <add>, %0, %cst [1] : vector<2x8x32xf32> to vector<2x32xf32>
    %2 = vector.shape_cast %1 : vector<2x32xf32> to vector<2x1x32xf32>
    %cst_2 = arith.constant 8.000000e+00 : f32
    %3 = vector.broadcast %cst_2 : f32 to vector<2x1x32xf32>
    %4 = arith.divf %2, %3 : vector<2x1x32xf32>
    %5 = vector.broadcast %4 : vector<2x1x32xf32> to vector<2x8x32xf32>
    %6 = arith.subf %0, %5 : vector<2x8x32xf32>
    %7 = arith.mulf %6, %6 : vector<2x8x32xf32>
    %cst_3 = arith.constant dense<0.000000e+00> : vector<2x32xf32>
    %8 = vector.multi_reduction <add>, %7, %cst_3 [1] : vector<2x8x32xf32> to vector<2x32xf32>
    %9 = vector.shape_cast %8 : vector<2x32xf32> to vector<2x1x32xf32>
    %cst_4 = arith.constant 7.000000e+00 : f32
    %10 = vector.broadcast %cst_4 : f32 to vector<2x1x32xf32>
    %11 = arith.divf %9, %10 : vector<2x1x32xf32>
    %12 = math.sqrt %11 : vector<2x1x32xf32>
    %cst_5 = arith.constant 9.99999993E-9 : f32
    %13 = vector.broadcast %cst_5 : f32 to vector<2x1x32xf32>
    %14 = arith.addf %12, %13 : vector<2x1x32xf32>
    %cst_6 = arith.constant 1.000000e+00 : f32
    %15 = vector.broadcast %cst_6 : f32 to vector<2x1x32xf32>
    %16 = arith.divf %15, %14 : vector<2x1x32xf32>
    %c0_7 = arith.constant 0 : index
    %c0_8 = arith.constant 0 : index
    %17 = vector.load %arg2[%c0_7, %c0_8] : memref<32x128xf32, #tpu.memory_space<vmem>>, vector<32x128xf32>
    %18 = arith.truncf %17 : vector<32x128xf32> to vector<32x128xbf16>
    %c0_9 = arith.constant 0 : index
    %c0_10 = arith.constant 0 : index
    %19 = vector.load %arg4[%c0_9, %c0_10] : memref<1x128xf32, #tpu.memory_space<vmem>>, vector<1x128xf32>
    %c0_11 = arith.constant 0 : index
    %c0_12 = arith.constant 0 : index
    %c0_13 = arith.constant 0 : index
    %20 = vector.load %arg1[%c0_11, %c0_12, %c0_13] : memref<2x8x32xf32, #tpu.memory_space<vmem>>, vector<2x8x32xf32>
    %21 = vector.broadcast %4 : vector<2x1x32xf32> to vector<2x8x32xf32>
    %22 = arith.subf %20, %21 : vector<2x8x32xf32>
    %23 = vector.broadcast %16 : vector<2x1x32xf32> to vector<2x8x32xf32>
    %24 = arith.mulf %22, %23 : vector<2x8x32xf32>
    %25 = tpu.transpose %24, [1, 0, 2] : vector<2x8x32xf32> -> vector<8x2x32xf32>
    %26 = vector.shape_cast %25 : vector<8x2x32xf32> to vector<16x32xf32>
    %27 = arith.truncf %26 : vector<16x32xf32> to vector<16x32xbf16>
    %cst_14 = arith.constant dense<0.000000e+00> : vector<16x128xf32>
    %28 = tpu.matmul %27, %18, %cst_14 {dimension_numbers = #tpu.dot_dimension_numbers<[1], [0], [0], [1], [0, 0, 1, 1], [], []>} : vector<16x32xbf16>, vector<32x128xbf16>, vector<16x128xf32> -> vector<16x128xf32>
    %29 = vector.broadcast %19 : vector<1x128xf32> to vector<16x128xf32>
    %30 = arith.addf %28, %29 : vector<16x128xf32>
    %31 = vector.shape_cast %30 : vector<16x128xf32> to vector<8x2x128xf32>
    %32 = arith.truncf %31 : vector<8x2x128xf32> to vector<8x2x128xbf16>
    %c0_15 = arith.constant 0 : index
    %c0_16 = arith.constant 0 : index
    %c0_17 = arith.constant 0 : index
    %33 = vector.load %arg8[%c0_15, %c0_16, %c0_17] : memref<8x2x128xbf16, #tpu.memory_space<vmem>>, vector<8x2x128xbf16>
    tpu.vector_store %arg8[%c0_15, %c0_16, %c0_17], %32 {strides = array<i32>} : memref<8x2x128xbf16, #tpu.memory_space<vmem>>, vector<8x2x128xbf16>,
    %c0_18 = arith.constant 0 : index
    %c0_19 = arith.constant 0 : index
    %34 = vector.load %arg3[%c0_18, %c0_19] : memref<32x128xf32, #tpu.memory_space<vmem>>, vector<32x128xf32>
    %35 = arith.truncf %34 : vector<32x128xf32> to vector<32x128xbf16>
    %cst_20 = arith.constant 0.000000e+00 : f32
    %36 = vector.broadcast %cst_20 : f32 to vector<2x32xf32>
    %cst_21 = arith.constant 0.000000e+00 : f32
    %37 = vector.broadcast %cst_21 : f32 to vector<2x32xf32>
    %c0_i32 = arith.constant 0 : i32
    %38 = arith.index_cast %c0_i32 : i32 to index
    %c0_22 = arith.constant 0 : index
    %c0_23 = arith.constant 0 : index
    %39 = vector.load %arg8[%38, %c0_22, %c0_23] : memref<8x2x128xbf16, #tpu.memory_space<vmem>>, vector<1x2x128xbf16>
    %40 = vector.shape_cast %39 : vector<1x2x128xbf16> to vector<2x128xbf16>
    %41 = arith.truncf %36 : vector<2x32xf32> to vector<2x32xbf16>
    %cst_24 = arith.constant dense<0.000000e+00> : vector<2x128xf32>
    %42 = tpu.matmul %41, %35, %cst_24 {dimension_numbers = #tpu.dot_dimension_numbers<[1], [0], [0], [1], [0, 0, 1, 1], [], []>} : vector<2x32xbf16>, vector<32x128xbf16>, vector<2x128xf32> -> vector<2x128xf32>
    %43 = arith.extf %40 : vector<2x128xbf16> to vector<2x128xf32>
    %44 = arith.addf %43, %42 : vector<2x128xf32>
    %45 = vector.extract_strided_slice %44 {offsets = [0, 0], sizes = [2, 96], strides = [1, 1]} : vector<2x128xf32> to vector<2x96xf32>
    %46 = arith.negf %45 : vector<2x96xf32>
    %47 = math.exp %46 : vector<2x96xf32>
    %cst_25 = arith.constant 1.000000e+00 : f32
    %48 = vector.broadcast %cst_25 : f32 to vector<2x96xf32>
    %49 = arith.addf %48, %47 : vector<2x96xf32>
    %50 = arith.divf %48, %49 : vector<2x96xf32>
    %51 = vector.extract_strided_slice %44 {offsets = [0, 96], sizes = [2, 32], strides = [1, 1]} : vector<2x128xf32> to vector<2x32xf32>
    %52 = math.tanh %51 : vector<2x32xf32>
    %53 = vector.extract_strided_slice %50 {offsets = [0, 0], sizes = [2, 32], strides = [1, 1]} : vector<2x96xf32> to vector<2x32xf32>
    %54 = vector.extract_strided_slice %50 {offsets = [0, 32], sizes = [2, 32], strides = [1, 1]} : vector<2x96xf32> to vector<2x32xf32>
    %55 = vector.extract_strided_slice %50 {offsets = [0, 64], sizes = [2, 32], strides = [1, 1]} : vector<2x96xf32> to vector<2x32xf32>
    %56 = arith.mulf %54, %37 : vector<2x32xf32>
    %57 = arith.mulf %53, %52 : vector<2x32xf32>
    %58 = arith.addf %56, %57 : vector<2x32xf32>
    %59 = math.tanh %58 : vector<2x32xf32>
    %60 = arith.mulf %55, %59 : vector<2x32xf32>
    %c1_i32 = arith.constant 1 : i32
    %61 = arith.index_cast %c1_i32 : i32 to index
    %c0_26 = arith.constant 0 : index
    %c0_27 = arith.constant 0 : index
    %62 = vector.load %arg8[%61, %c0_26, %c0_27] : memref<8x2x128xbf16, #tpu.memory_space<vmem>>, vector<1x2x128xbf16>
    %63 = vector.shape_cast %62 : vector<1x2x128xbf16> to vector<2x128xbf16>
    %64 = arith.truncf %60 : vector<2x32xf32> to vector<2x32xbf16>
    %cst_28 = arith.constant dense<0.000000e+00> : vector<2x128xf32>
    %65 = tpu.matmul %64, %35, %cst_28 {dimension_numbers = #tpu.dot_dimension_numbers<[1], [0], [0], [1], [0, 0, 1, 1], [], []>} : vector<2x32xbf16>, vector<32x128xbf16>, vector<2x128xf32> -> vector<2x128xf32>
    %66 = arith.extf %63 : vector<2x128xbf16> to vector<2x128xf32>
    %67 = arith.addf %66, %65 : vector<2x128xf32>
    %68 = vector.extract_strided_slice %67 {offsets = [0, 0], sizes = [2, 96], strides = [1, 1]} : vector<2x128xf32> to vector<2x96xf32>
    %69 = arith.negf %68 : vector<2x96xf32>
    %70 = math.exp %69 : vector<2x96xf32>
    %cst_29 = arith.constant 1.000000e+00 : f32
    %71 = vector.broadcast %cst_29 : f32 to vector<2x96xf32>
    %72 = arith.addf %71, %70 : vector<2x96xf32>
    %73 = arith.divf %71, %72 : vector<2x96xf32>
    %74 = vector.extract_strided_slice %67 {offsets = [0, 96], sizes = [2, 32], strides = [1, 1]} : vector<2x128xf32> to vector<2x32xf32>
    %75 = math.tanh %74 : vector<2x32xf32>
    %76 = vector.extract_strided_slice %73 {offsets = [0, 0], sizes = [2, 32], strides = [1, 1]} : vector<2x96xf32> to vector<2x32xf32>
    %77 = vector.extract_strided_slice %73 {offsets = [0, 32], sizes = [2, 32], strides = [1, 1]} : vector<2x96xf32> to vector<2x32xf32>
    %78 = vector.extract_strided_slice %73 {offsets = [0, 64], sizes = [2, 32], strides = [1, 1]} : vector<2x96xf32> to vector<2x32xf32>
    %79 = arith.mulf %77, %58 : vector<2x32xf32>
    %80 = arith.mulf %76, %75 : vector<2x32xf32>
    %81 = arith.addf %79, %80 : vector<2x32xf32>
    %82 = math.tanh %81 : vector<2x32xf32>
    %83 = arith.mulf %78, %82 : vector<2x32xf32>
    %c2_i32 = arith.constant 2 : i32
    %84 = arith.index_cast %c2_i32 : i32 to index
    %c0_30 = arith.constant 0 : index
    %c0_31 = arith.constant 0 : index
    %85 = vector.load %arg8[%84, %c0_30, %c0_31] : memref<8x2x128xbf16, #tpu.memory_space<vmem>>, vector<1x2x128xbf16>
    %86 = vector.shape_cast %85 : vector<1x2x128xbf16> to vector<2x128xbf16>
    %87 = arith.truncf %83 : vector<2x32xf32> to vector<2x32xbf16>
    %cst_32 = arith.constant dense<0.000000e+00> : vector<2x128xf32>
    %88 = tpu.matmul %87, %35, %cst_32 {dimension_numbers = #tpu.dot_dimension_numbers<[1], [0], [0], [1], [0, 0, 1, 1], [], []>} : vector<2x32xbf16>, vector<32x128xbf16>, vector<2x128xf32> -> vector<2x128xf32>
    %89 = arith.extf %86 : vector<2x128xbf16> to vector<2x128xf32>
    %90 = arith.addf %89, %88 : vector<2x128xf32>
    %91 = vector.extract_strided_slice %90 {offsets = [0, 0], sizes = [2, 96], strides = [1, 1]} : vector<2x128xf32> to vector<2x96xf32>
    %92 = arith.negf %91 : vector<2x96xf32>
    %93 = math.exp %92 : vector<2x96xf32>
    %cst_33 = arith.constant 1.000000e+00 : f32
    %94 = vector.broadcast %cst_33 : f32 to vector<2x96xf32>
    %95 = arith.addf %94, %93 : vector<2x96xf32>
    %96 = arith.divf %94, %95 : vector<2x96xf32>
    %97 = vector.extract_strided_slice %90 {offsets = [0, 96], sizes = [2, 32], strides = [1, 1]} : vector<2x128xf32> to vector<2x32xf32>
    %98 = math.tanh %97 : vector<2x32xf32>
    %99 = vector.extract_strided_slice %96 {offsets = [0, 0], sizes = [2, 32], strides = [1, 1]} : vector<2x96xf32> to vector<2x32xf32>
    %100 = vector.extract_strided_slice %96 {offsets = [0, 32], sizes = [2, 32], strides = [1, 1]} : vector<2x96xf32> to vector<2x32xf32>
    %101 = vector.extract_strided_slice %96 {offsets = [0, 64], sizes = [2, 32], strides = [1, 1]} : vector<2x96xf32> to vector<2x32xf32>
    %102 = arith.mulf %100, %81 : vector<2x32xf32>
    %103 = arith.mulf %99, %98 : vector<2x32xf32>
    %104 = arith.addf %102, %103 : vector<2x32xf32>
    %105 = math.tanh %104 : vector<2x32xf32>
    %106 = arith.mulf %101, %105 : vector<2x32xf32>
    %c3_i32 = arith.constant 3 : i32
    %107 = arith.index_cast %c3_i32 : i32 to index
    %c0_34 = arith.constant 0 : index
    %c0_35 = arith.constant 0 : index
    %108 = vector.load %arg8[%107, %c0_34, %c0_35] : memref<8x2x128xbf16, #tpu.memory_space<vmem>>, vector<1x2x128xbf16>
    %109 = vector.shape_cast %108 : vector<1x2x128xbf16> to vector<2x128xbf16>
    %110 = arith.truncf %106 : vector<2x32xf32> to vector<2x32xbf16>
    %cst_36 = arith.constant dense<0.000000e+00> : vector<2x128xf32>
    %111 = tpu.matmul %110, %35, %cst_36 {dimension_numbers = #tpu.dot_dimension_numbers<[1], [0], [0], [1], [0, 0, 1, 1], [], []>} : vector<2x32xbf16>, vector<32x128xbf16>, vector<2x128xf32> -> vector<2x128xf32>
    %112 = arith.extf %109 : vector<2x128xbf16> to vector<2x128xf32>
    %113 = arith.addf %112, %111 : vector<2x128xf32>
    %114 = vector.extract_strided_slice %113 {offsets = [0, 0], sizes = [2, 96], strides = [1, 1]} : vector<2x128xf32> to vector<2x96xf32>
    %115 = arith.negf %114 : vector<2x96xf32>
    %116 = math.exp %115 : vector<2x96xf32>
    %cst_37 = arith.constant 1.000000e+00 : f32
    %117 = vector.broadcast %cst_37 : f32 to vector<2x96xf32>
    %118 = arith.addf %117, %116 : vector<2x96xf32>
    %119 = arith.divf %117, %118 : vector<2x96xf32>
    %120 = vector.extract_strided_slice %113 {offsets = [0, 96], sizes = [2, 32], strides = [1, 1]} : vector<2x128xf32> to vector<2x32xf32>
    %121 = math.tanh %120 : vector<2x32xf32>
    %122 = vector.extract_strided_slice %119 {offsets = [0, 0], sizes = [2, 32], strides = [1, 1]} : vector<2x96xf32> to vector<2x32xf32>
    %123 = vector.extract_strided_slice %119 {offsets = [0, 32], sizes = [2, 32], strides = [1, 1]} : vector<2x96xf32> to vector<2x32xf32>
    %124 = vector.extract_strided_slice %119 {offsets = [0, 64], sizes = [2, 32], strides = [1, 1]} : vector<2x96xf32> to vector<2x32xf32>
    %125 = arith.mulf %123, %104 : vector<2x32xf32>
    %126 = arith.mulf %122, %121 : vector<2x32xf32>
    %127 = arith.addf %125, %126 : vector<2x32xf32>
    %128 = math.tanh %127 : vector<2x32xf32>
    %129 = arith.mulf %124, %128 : vector<2x32xf32>
    %c4_i32 = arith.constant 4 : i32
    %130 = arith.index_cast %c4_i32 : i32 to index
    %c0_38 = arith.constant 0 : index
    %c0_39 = arith.constant 0 : index
    %131 = vector.load %arg8[%130, %c0_38, %c0_39] : memref<8x2x128xbf16, #tpu.memory_space<vmem>>, vector<1x2x128xbf16>
    %132 = vector.shape_cast %131 : vector<1x2x128xbf16> to vector<2x128xbf16>
    %133 = arith.truncf %129 : vector<2x32xf32> to vector<2x32xbf16>
    %cst_40 = arith.constant dense<0.000000e+00> : vector<2x128xf32>
    %134 = tpu.matmul %133, %35, %cst_40 {dimension_numbers = #tpu.dot_dimension_numbers<[1], [0], [0], [1], [0, 0, 1, 1], [], []>} : vector<2x32xbf16>, vector<32x128xbf16>, vector<2x128xf32> -> vector<2x128xf32>
    %135 = arith.extf %132 : vector<2x128xbf16> to vector<2x128xf32>
    %136 = arith.addf %135, %134 : vector<2x128xf32>
    %137 = vector.extract_strided_slice %136 {offsets = [0, 0], sizes = [2, 96], strides = [1, 1]} : vector<2x128xf32> to vector<2x96xf32>
    %138 = arith.negf %137 : vector<2x96xf32>
    %139 = math.exp %138 : vector<2x96xf32>
    %cst_41 = arith.constant 1.000000e+00 : f32
    %140 = vector.broadcast %cst_41 : f32 to vector<2x96xf32>
    %141 = arith.addf %140, %139 : vector<2x96xf32>
    %142 = arith.divf %140, %141 : vector<2x96xf32>
    %143 = vector.extract_strided_slice %136 {offsets = [0, 96], sizes = [2, 32], strides = [1, 1]} : vector<2x128xf32> to vector<2x32xf32>
    %144 = math.tanh %143 : vector<2x32xf32>
    %145 = vector.extract_strided_slice %142 {offsets = [0, 0], sizes = [2, 32], strides = [1, 1]} : vector<2x96xf32> to vector<2x32xf32>
    %146 = vector.extract_strided_slice %142 {offsets = [0, 32], sizes = [2, 32], strides = [1, 1]} : vector<2x96xf32> to vector<2x32xf32>
    %147 = vector.extract_strided_slice %142 {offsets = [0, 64], sizes = [2, 32], strides = [1, 1]} : vector<2x96xf32> to vector<2x32xf32>
    %148 = arith.mulf %146, %127 : vector<2x32xf32>
    %149 = arith.mulf %145, %144 : vector<2x32xf32>
    %150 = arith.addf %148, %149 : vector<2x32xf32>
    %151 = math.tanh %150 : vector<2x32xf32>
    %152 = arith.mulf %147, %151 : vector<2x32xf32>
    %c5_i32 = arith.constant 5 : i32
    %153 = arith.index_cast %c5_i32 : i32 to index
    %c0_42 = arith.constant 0 : index
    %c0_43 = arith.constant 0 : index
    %154 = vector.load %arg8[%153, %c0_42, %c0_43] : memref<8x2x128xbf16, #tpu.memory_space<vmem>>, vector<1x2x128xbf16>
    %155 = vector.shape_cast %154 : vector<1x2x128xbf16> to vector<2x128xbf16>
    %156 = arith.truncf %152 : vector<2x32xf32> to vector<2x32xbf16>
    %cst_44 = arith.constant dense<0.000000e+00> : vector<2x128xf32>
    %157 = tpu.matmul %156, %35, %cst_44 {dimension_numbers = #tpu.dot_dimension_numbers<[1], [0], [0], [1], [0, 0, 1, 1], [], []>} : vector<2x32xbf16>, vector<32x128xbf16>, vector<2x128xf32> -> vector<2x128xf32>
    %158 = arith.extf %155 : vector<2x128xbf16> to vector<2x128xf32>
    %159 = arith.addf %158, %157 : vector<2x128xf32>
    %160 = vector.extract_strided_slice %159 {offsets = [0, 0], sizes = [2, 96], strides = [1, 1]} : vector<2x128xf32> to vector<2x96xf32>
    %161 = arith.negf %160 : vector<2x96xf32>
    %162 = math.exp %161 : vector<2x96xf32>
    %cst_45 = arith.constant 1.000000e+00 : f32
    %163 = vector.broadcast %cst_45 : f32 to vector<2x96xf32>
    %164 = arith.addf %163, %162 : vector<2x96xf32>
    %165 = arith.divf %163, %164 : vector<2x96xf32>
    %166 = vector.extract_strided_slice %159 {offsets = [0, 96], sizes = [2, 32], strides = [1, 1]} : vector<2x128xf32> to vector<2x32xf32>
    %167 = math.tanh %166 : vector<2x32xf32>
    %168 = vector.extract_strided_slice %165 {offsets = [0, 0], sizes = [2, 32], strides = [1, 1]} : vector<2x96xf32> to vector<2x32xf32>
    %169 = vector.extract_strided_slice %165 {offsets = [0, 32], sizes = [2, 32], strides = [1, 1]} : vector<2x96xf32> to vector<2x32xf32>
    %170 = vector.extract_strided_slice %165 {offsets = [0, 64], sizes = [2, 32], strides = [1, 1]} : vector<2x96xf32> to vector<2x32xf32>
    %171 = arith.mulf %169, %150 : vector<2x32xf32>
    %172 = arith.mulf %168, %167 : vector<2x32xf32>
    %173 = arith.addf %171, %172 : vector<2x32xf32>
    %174 = math.tanh %173 : vector<2x32xf32>
    %175 = arith.mulf %170, %174 : vector<2x32xf32>
    %c6_i32 = arith.constant 6 : i32
    %176 = arith.index_cast %c6_i32 : i32 to index
    %c0_46 = arith.constant 0 : index
    %c0_47 = arith.constant 0 : index
    %177 = vector.load %arg8[%176, %c0_46, %c0_47] : memref<8x2x128xbf16, #tpu.memory_space<vmem>>, vector<1x2x128xbf16>
    %178 = vector.shape_cast %177 : vector<1x2x128xbf16> to vector<2x128xbf16>
    %179 = arith.truncf %175 : vector<2x32xf32> to vector<2x32xbf16>
    %cst_48 = arith.constant dense<0.000000e+00> : vector<2x128xf32>
    %180 = tpu.matmul %179, %35, %cst_48 {dimension_numbers = #tpu.dot_dimension_numbers<[1], [0], [0], [1], [0, 0, 1, 1], [], []>} : vector<2x32xbf16>, vector<32x128xbf16>, vector<2x128xf32> -> vector<2x128xf32>
    %181 = arith.extf %178 : vector<2x128xbf16> to vector<2x128xf32>
    %182 = arith.addf %181, %180 : vector<2x128xf32>
    %183 = vector.extract_strided_slice %182 {offsets = [0, 0], sizes = [2, 96], strides = [1, 1]} : vector<2x128xf32> to vector<2x96xf32>
    %184 = arith.negf %183 : vector<2x96xf32>
    %185 = math.exp %184 : vector<2x96xf32>
    %cst_49 = arith.constant 1.000000e+00 : f32
    %186 = vector.broadcast %cst_49 : f32 to vector<2x96xf32>
    %187 = arith.addf %186, %185 : vector<2x96xf32>
    %188 = arith.divf %186, %187 : vector<2x96xf32>
    %189 = vector.extract_strided_slice %182 {offsets = [0, 96], sizes = [2, 32], strides = [1, 1]} : vector<2x128xf32> to vector<2x32xf32>
    %190 = math.tanh %189 : vector<2x32xf32>
    %191 = vector.extract_strided_slice %188 {offsets = [0, 0], sizes = [2, 32], strides = [1, 1]} : vector<2x96xf32> to vector<2x32xf32>
    %192 = vector.extract_strided_slice %188 {offsets = [0, 32], sizes = [2, 32], strides = [1, 1]} : vector<2x96xf32> to vector<2x32xf32>
    %193 = vector.extract_strided_slice %188 {offsets = [0, 64], sizes = [2, 32], strides = [1, 1]} : vector<2x96xf32> to vector<2x32xf32>
    %194 = arith.mulf %192, %173 : vector<2x32xf32>
    %195 = arith.mulf %191, %190 : vector<2x32xf32>
    %196 = arith.addf %194, %195 : vector<2x32xf32>
    %197 = math.tanh %196 : vector<2x32xf32>
    %198 = arith.mulf %193, %197 : vector<2x32xf32>
    %c7_i32 = arith.constant 7 : i32
    %199 = arith.index_cast %c7_i32 : i32 to index
    %c0_50 = arith.constant 0 : index
    %c0_51 = arith.constant 0 : index
    %200 = vector.load %arg8[%199, %c0_50, %c0_51] : memref<8x2x128xbf16, #tpu.memory_space<vmem>>, vector<1x2x128xbf16>
    %201 = vector.shape_cast %200 : vector<1x2x128xbf16> to vector<2x128xbf16>
    %202 = arith.truncf %198 : vector<2x32xf32> to vector<2x32xbf16>
    %cst_52 = arith.constant dense<0.000000e+00> : vector<2x128xf32>
    %203 = tpu.matmul %202, %35, %cst_52 {dimension_numbers = #tpu.dot_dimension_numbers<[1], [0], [0], [1], [0, 0, 1, 1], [], []>} : vector<2x32xbf16>, vector<32x128xbf16>, vector<2x128xf32> -> vector<2x128xf32>
    %204 = arith.extf %201 : vector<2x128xbf16> to vector<2x128xf32>
    %205 = arith.addf %204, %203 : vector<2x128xf32>
    %206 = vector.extract_strided_slice %205 {offsets = [0, 0], sizes = [2, 96], strides = [1, 1]} : vector<2x128xf32> to vector<2x96xf32>
    %207 = arith.negf %206 : vector<2x96xf32>
    %208 = math.exp %207 : vector<2x96xf32>
    %cst_53 = arith.constant 1.000000e+00 : f32
    %209 = vector.broadcast %cst_53 : f32 to vector<2x96xf32>
    %210 = arith.addf %209, %208 : vector<2x96xf32>
    %211 = arith.divf %209, %210 : vector<2x96xf32>
    %212 = vector.extract_strided_slice %205 {offsets = [0, 96], sizes = [2, 32], strides = [1, 1]} : vector<2x128xf32> to vector<2x32xf32>
    %213 = math.tanh %212 : vector<2x32xf32>
    %214 = vector.extract_strided_slice %211 {offsets = [0, 0], sizes = [2, 32], strides = [1, 1]} : vector<2x96xf32> to vector<2x32xf32>
    %215 = vector.extract_strided_slice %211 {offsets = [0, 32], sizes = [2, 32], strides = [1, 1]} : vector<2x96xf32> to vector<2x32xf32>
    %216 = vector.extract_strided_slice %211 {offsets = [0, 64], sizes = [2, 32], strides = [1, 1]} : vector<2x96xf32> to vector<2x32xf32>
    %217 = arith.mulf %215, %196 : vector<2x32xf32>
    %218 = arith.mulf %214, %213 : vector<2x32xf32>
    %219 = arith.addf %217, %218 : vector<2x32xf32>
    %220 = math.tanh %219 : vector<2x32xf32>
    %221 = arith.mulf %216, %220 : vector<2x32xf32>
    %c8_i32 = arith.constant 8 : i32
    %222 = arith.truncf %221 : vector<2x32xf32> to vector<2x32xbf16>
    %c0_54 = arith.constant 0 : index
    %c0_55 = arith.constant 0 : index
    %223 = vector.load %arg5[%c0_54, %c0_55] : memref<32x128xf32, #tpu.memory_space<vmem>>, vector<32x128xf32>
    %224 = arith.truncf %223 : vector<32x128xf32> to vector<32x128xbf16>
    %cst_56 = arith.constant dense<0.000000e+00> : vector<2x128xf32>
    %225 = tpu.matmul %222, %224, %cst_56 {dimension_numbers = #tpu.dot_dimension_numbers<[1], [0], [0], [1], [0, 0, 1, 1], [], []>} : vector<2x32xbf16>, vector<32x128xbf16>, vector<2x128xf32> -> vector<2x128xf32>
    %c0_57 = arith.constant 0 : index
    %c0_58 = arith.constant 0 : index
    %226 = vector.load %arg6[%c0_57, %c0_58] : memref<1x128xf32, #tpu.memory_space<vmem>>, vector<1x128xf32>
    %227 = vector.broadcast %226 : vector<1x128xf32> to vector<2x128xf32>
    %228 = arith.addf %225, %227 : vector<2x128xf32>
    %c0_59 = arith.constant 0 : index
    %c0_60 = arith.constant 0 : index
    %229 = vector.load %arg7[%c0_59, %c0_60] : memref<2x128xf32, #tpu.memory_space<vmem>>, vector<2x128xf32>
    tpu.vector_store %arg7[%c0_59, %c0_60], %228 {strides = array<i32>} : memref<2x128xf32, #tpu.memory_space<vmem>>, vector<2x128xf32>,
    return
  }
  func.func @transform_0(%arg0: i32) -> (i32, i32, i32) {
    %c0_i32 = arith.constant 0 : i32
    %c0_i32_0 = arith.constant 0 : i32
    %c0_i32_1 = arith.constant 0 : i32
    return %arg0, %c0_i32, %c0_i32_0 : i32, i32, i32
  }
  func.func @transform_1(%arg0: i32) -> (i32, i32) {
    %c0_i32 = arith.constant 0 : i32
    %c0_i32_0 = arith.constant 0 : i32
    %c0_i32_1 = arith.constant 0 : i32
    return %c0_i32, %c0_i32_0 : i32, i32
  }
  func.func @transform_2(%arg0: i32) -> (i32, i32) {
    %c0_i32 = arith.constant 0 : i32
    %c0_i32_0 = arith.constant 0 : i32
    %c0_i32_1 = arith.constant 0 : i32
    return %c0_i32, %c0_i32_0 : i32, i32
  }
  func.func @transform_3(%arg0: i32) -> (i32, i32) {
    %c0_i32 = arith.constant 0 : i32
    %c0_i32_0 = arith.constant 0 : i32
    %c0_i32_1 = arith.constant 0 : i32
    return %c0_i32, %c0_i32_0 : i32, i32
  }
  func.func @transform_4(%arg0: i32) -> (i32, i32) {
    %c0_i32 = arith.constant 0 : i32
    %c0_i32_0 = arith.constant 0 : i32
    %c0_i32_1 = arith.constant 0 : i32
    return %c0_i32, %c0_i32_0 : i32, i32
  }
  func.func @transform_5(%arg0: i32) -> (i32, i32) {
    %c0_i32 = arith.constant 0 : i32
    %c0_i32_0 = arith.constant 0 : i32
    %c0_i32_1 = arith.constant 0 : i32
    return %c0_i32, %c0_i32_0 : i32, i32
  }
  func.func @transform_6(%arg0: i32) -> (i32, i32) {
    %c0_i32 = arith.constant 0 : i32
    %c0_i32_0 = arith.constant 0 : i32
    return %arg0, %c0_i32 : i32, i32
  }
}

</mosaic_0001>

<llo_original>
// kernel: tpu_custom_call.1
$region0: #{tpu_custom_call.1}
  #allocation0 [shape = 'u32[]', space=smem, size = 0x4, offset = 0x4, fixed_abs, tag = 'smem constant byte address 0x4 - core index']
  #allocation1 [shape = 'u32[72,128]{1,0:T(1,128)}', space=vmem, size = 0x9000, scoped, tag = 'internal scratch']
  #allocation2 [shape = 'bf16[8,2,128]{2,1,0:T(2,128)(2,1)}', space=vmem, size = 0x1000, scoped, tag = 'scratch operand']
  %s0 = inlined_call_operand.hbm [shape: f32[2,8,32], index: 0, kind: input, shape index: {}]
  %s1 = inlined_call_operand.hbm [shape: f32[32,128], index: 1, kind: input, shape index: {}]
  %s2 = inlined_call_operand.hbm [shape: f32[32,128], index: 2, kind: input, shape index: {}]
  %s3 = inlined_call_operand.vmem [shape: f32[1,128], index: 3, kind: input, shape index: {}]
  %s4 = inlined_call_operand.hbm [shape: f32[32,128], index: 4, kind: input, shape index: {}]
  %s5 = inlined_call_operand.vmem [shape: f32[1,128], index: 5, kind: input, shape index: {}]
  %s6 = inlined_call_operand.hbm [shape: f32[2,128], index: 6, kind: output, shape index: {}]
  %s7 = sld [smem:[#allocation0]]
  $region50: #{tpu_custom_call.1} parent=0
    _
  %s9 = ssub.s32 1, %s7
  %s10 = scalar_select 0, %s9, %s7
  $region1: #{tpu_custom_call.1} parent=0
    #allocation3 [shape = 'u8[8192]{0}', space=vmem, size = 0x2000, scoped, tag = 'input window, operand 0, single buffered']
    #allocation4 [shape = 's32[1]{0}', space=sflag, size = 0x4, scoped, tag = 'scoped memory for tpu_custom_call.1']
    #allocation5 [shape = 's32[1]{0}', space=sflag, size = 0x4, scoped, tag = 'scoped memory for tpu_custom_call.1']
    #allocation6 [shape = 'u8[16384]{0}', space=vmem, size = 0x4000, scoped, tag = 'input window, operand 1, single buffered']
    #allocation7 [shape = 's32[1]{0}', space=sflag, size = 0x4, scoped, tag = 'scoped memory for tpu_custom_call.1']
    #allocation8 [shape = 'u8[16384]{0}', space=vmem, size = 0x4000, scoped, tag = 'input window, operand 2, single buffered']
    #allocation9 [shape = 'u8[16384]{0}', space=vmem, size = 0x4000, scoped, tag = 'input window, operand 4, single buffered']
    #allocation10 [shape = 's32[1]{0}', space=sflag, size = 0x4, scoped, tag = 'scoped memory for tpu_custom_call.1']
    #allocation11 [shape = 'u8[1024]{0}', space=vmem, size = 0x400, scoped, tag = 'output window, operand 0, single buffered']
    %11 = vsyncpa [#allocation4], 0
    %12 = vsyncpa [#allocation7], 0
    %13 = vsyncpa [#allocation10], 0
    %14 = vsyncpa [#allocation5], 0
    // Predicated region
    $region2: #{tpu_custom_call.1} parent=1 // pred_check
      _
    $region3: #{tpu_custom_call.1} parent=1 // pred_check_branch
      %16 = sbr.rel (0) target = $region5
    $region4: #{tpu_custom_call.1} parent=1 // pred_region
      %18 = vsyncadd [#allocation4], 0
      %s19 = sshll.u32 %s0, 4
      %s20 = int_to_ptr.hbm [resolvable:$true] %s19
      %s21 = sshll.u32 [#allocation3], 4
      %s22 = int_to_ptr.vmem [resolvable:$true] %s21
      %27 = dma.hbm_to_vmem [thread:$0]  %s20, 256, %s22, [#allocation4], 128, 128, 8
    $region5: #{tpu_custom_call.1} parent=1 // pred_fallthru
      _
    // Predicated region
    $region6: #{tpu_custom_call.1} parent=1 // pred_check
      _
    $region7: #{tpu_custom_call.1} parent=1 // pred_check_branch
      %29 = sbr.rel (0) target = $region9
    $region8: #{tpu_custom_call.1} parent=1 // pred_region
      %31 = vsyncadd [#allocation7], 0
      %s32 = sshll.u32 %s1, 4
      %s33 = int_to_ptr.hbm [resolvable:$true] %s32
      %s34 = sshll.u32 [#allocation6], 4
      %s35 = int_to_ptr.vmem [resolvable:$true] %s34
      %40 = dma.hbm_to_vmem [thread:$0]  %s33, 512, %s35, [#allocation7], 128, 128, 8
    $region9: #{tpu_custom_call.1} parent=1 // pred_fallthru
      _
    // Predicated region
    $region10: #{tpu_custom_call.1} parent=1 // pred_check
      _
    $region11: #{tpu_custom_call.1} parent=1 // pred_check_branch
      %42 = sbr.rel (0) target = $region13
    $region12: #{tpu_custom_call.1} parent=1 // pred_region
      %44 = vsyncadd [#allocation7], 0
      %s45 = sshll.u32 %s2, 4
      %s46 = int_to_ptr.hbm [resolvable:$true] %s45
      %s47 = sshll.u32 [#allocation8], 4
      %s48 = int_to_ptr.vmem [resolvable:$true] %s47
      %53 = dma.hbm_to_vmem [thread:$0]  %s46, 512, %s48, [#allocation7], 128, 128, 8
    $region13: #{tpu_custom_call.1} parent=1 // pred_fallthru
      _
    // Predicated region
    $region14: #{tpu_custom_call.1} parent=1 // pred_check
      _
    $region15: #{tpu_custom_call.1} parent=1 // pred_check_branch
      %55 = sbr.rel (0) target = $region17
    $region16: #{tpu_custom_call.1} parent=1 // pred_region
      _
    $region17: #{tpu_custom_call.1} parent=1 // pred_fallthru
      _
    // Predicated region
    $region18: #{tpu_custom_call.1} parent=1 // pred_check
      _
    $region19: #{tpu_custom_call.1} parent=1 // pred_check_branch
      %57 = sbr.rel (0) target = $region21
    $region20: #{tpu_custom_call.1} parent=1 // pred_region
      %59 = vsyncadd [#allocation10], 0
      %s60 = sshll.u32 %s4, 4
      %s61 = int_to_ptr.hbm [resolvable:$true] %s60
      %s62 = sshll.u32 [#allocation9], 4
      %s63 = int_to_ptr.vmem [resolvable:$true] %s62
      %68 = dma.hbm_to_vmem [thread:$0]  %s61, 512, %s63, [#allocation10], 128, 128, 8
    $region21: #{tpu_custom_call.1} parent=1 // pred_fallthru
      _
    // Predicated region
    $region22: #{tpu_custom_call.1} parent=1 // pred_check
      _
    $region23: #{tpu_custom_call.1} parent=1 // pred_check_branch
      %70 = sbr.rel (0) target = $region25
    $region24: #{tpu_custom_call.1} parent=1 // pred_region
      _
    $region25: #{tpu_custom_call.1} parent=1 // pred_fallthru
      _
    // Predicated region
    $region26: #{tpu_custom_call.1} parent=1 // pred_check
      _
    $region27: #{tpu_custom_call.1} parent=1 // pred_check_branch
      %72 = sbr.rel (0) target = $region29
    $region28: #{tpu_custom_call.1} parent=1 // pred_region
      %74 = dma.done [#allocation4], 256
    $region29: #{tpu_custom_call.1} parent=1 // pred_fallthru
      _
    // Predicated region
    $region30: #{tpu_custom_call.1} parent=1 // pred_check
      _
    $region31: #{tpu_custom_call.1} parent=1 // pred_check_branch
      %76 = sbr.rel (0) target = $region33
    $region32: #{tpu_custom_call.1} parent=1 // pred_region
      %78 = dma.done [#allocation7], 512
    $region33: #{tpu_custom_call.1} parent=1 // pred_fallthru
      _
    // Predicated region
    $region34: #{tpu_custom_call.1} parent=1 // pred_check
      _
    $region35: #{tpu_custom_call.1} parent=1 // pred_check_branch
      %80 = sbr.rel (0) target = $region37
    $region36: #{tpu_custom_call.1} parent=1 // pred_region
      %82 = dma.done [#allocation7], 512
    $region37: #{tpu_custom_call.1} parent=1 // pred_fallthru
      _
    // Predicated region
    $region38: #{tpu_custom_call.1} parent=1 // pred_check
      _
    $region39: #{tpu_custom_call.1} parent=1 // pred_check_branch
      %84 = sbr.rel (0) target = $region41
    $region40: #{tpu_custom_call.1} parent=1 // pred_region
      %86 = dma.done [#allocation10], 512
    $region41: #{tpu_custom_call.1} parent=1 // pred_fallthru
      _
    %v88 = vld [vmem:[#allocation3] sm:$0xff]
    %v89 = vld [vmem:[#allocation3 + $0x8] sm:$0xff]
    %vm90 = vcmask 261120
    %v91 = vsel %vm90, %v88, 0.0
    %v92 = vrot.slane %v91, 4
    %v93 = vadd.f32 %v91, %v92
    %v94 = vrot.slane %v93, 2
    %v95 = vadd.f32 %v93, %v94
    %v96 = vrot.slane %v95, 1
    %v97 = vadd.f32 %v95, %v96
    %v98 = vsel %vm90, %v89, 0.0
    %v99 = vrot.slane %v98, 4
    %v100 = vadd.f32 %v98, %v99
    %v101 = vrot.slane %v100, 2
    %v102 = vadd.f32 %v100, %v101
    %v103 = vrot.slane %v102, 1
    %v104 = vadd.f32 %v102, %v103
    %v105 = vrcp.pop 8.0
    %v106 = vmul.f32 8.0, %v105
    %v107 = vsub.f32 1.0, %v106
    %v108 = vmul.f32 %v105, %v107
    %v109 = vadd.f32 %v105, %v108
    %vm110 = vweird.f32 %v105
    %v111 = vsel %vm110, %v105, %v109
    %v112 = vmul.f32 %v97, %v111
    %v113 = vmul.f32 %v104, %v111
    %v114 = vsub.f32 %v88, %v112
    %v115 = vsub.f32 %v89, %v113
    %v116 = vmul.f32 %v114, %v114
    %v117 = vmul.f32 %v115, %v115
    %v118 = vsel %vm90, %v116, 0.0
    %v119 = vrot.slane %v118, 4
    %v120 = vadd.f32 %v118, %v119
    %v121 = vrot.slane %v120, 2
    %v122 = vadd.f32 %v120, %v121
    %v123 = vrot.slane %v122, 1
    %v124 = vadd.f32 %v122, %v123
    %v125 = vsel %vm90, %v117, 0.0
    %v126 = vrot.slane %v125, 4
    %v127 = vadd.f32 %v125, %v126
    %v128 = vrot.slane %v127, 2
    %v129 = vadd.f32 %v127, %v128
    %v130 = vrot.slane %v129, 1
    %v131 = vadd.f32 %v129, %v130
    %v132 = vrcp.pop 7.0
    %v133 = vmul.f32 7.0, %v132
    %v134 = vsub.f32 1.0, %v133
    %v135 = vmul.f32 %v132, %v134
    %v136 = vadd.f32 %v132, %v135
    %vm137 = vweird.f32 %v132
    %v138 = vsel %vm137, %v132, %v136
    %v139 = vmul.f32 %v124, %v138
    %v140 = vmul.f32 %v131, %v138
    %v141 = vrsqrt.pop %v139
    %v142 = vmul.f32 %v141, %v139
    %v143 = vmul.f32 %v142, %v141
    %v144 = vmul.f32 0.5, %v143
    %v145 = vsub.f32 1.5, %v144
    %v146 = vmul.f32 %v141, %v145
    %v147 = vmul.f32 %v139, %v146
    %vm148 = vcmp.eq.f32.partialorder %v139, inf
    %v149 = vsel %vm148, %v139, %v147
    %vm150 = vcmp.eq.f32.partialorder %v139, 0.0
    %v151 = vand.u32 %v139, 2147483648
    %v152 = vsel %vm150, %v151, %v149
    %v153 = vrsqrt.pop %v140
    %v154 = vmul.f32 %v153, %v140
    %v155 = vmul.f32 %v154, %v153
    %v156 = vmul.f32 0.5, %v155
    %v157 = vsub.f32 1.5, %v156
    %v158 = vmul.f32 %v153, %v157
    %v159 = vmul.f32 %v140, %v158
    %vm160 = vcmp.eq.f32.partialorder %v140, inf
    %v161 = vsel %vm160, %v140, %v159
    %vm162 = vcmp.eq.f32.partialorder %v140, 0.0
    %v163 = vand.u32 %v140, 2147483648
    %v164 = vsel %vm162, %v163, %v161
    %v165 = vadd.f32 %v152, 1e-08
    %v166 = vadd.f32 %v164, 1e-08
    %v167 = vrcp.pop %v165
    %v168 = vmul.f32 %v165, %v167
    %v169 = vsub.f32 1.0, %v168
    %v170 = vmul.f32 %v167, %v169
    %v171 = vadd.f32 %v167, %v170
    %vm172 = vweird.f32 %v165
    %vm173 = vweird.f32 %v167
    %vm174 = vmor %vm172, %vm173
    %v175 = vsel %vm174, %v167, %v171
    %v176 = vand.u32 2147483647, %v165
    %vm177 = vcmp.eq.f32.partialorder %v176, 8.507059e+37
    %v178 = vand.u32 %v165, 2147483648
    %v179 = vor.u32 1.1754944e-38, %v178
    %v180 = vsel %vm177, %v179, %v175
    %v181 = vmul.f32 1.0, %v180
    %v182 = vrcp.pop %v166
    %v183 = vmul.f32 %v166, %v182
    %v184 = vsub.f32 1.0, %v183
    %v185 = vmul.f32 %v182, %v184
    %v186 = vadd.f32 %v182, %v185
    %vm187 = vweird.f32 %v166
    %vm188 = vweird.f32 %v182
    %vm189 = vmor %vm187, %vm188
    %v190 = vsel %vm189, %v182, %v186
    %v191 = vand.u32 2147483647, %v166
    %vm192 = vcmp.eq.f32.partialorder %v191, 8.507059e+37
    %v193 = vand.u32 %v166, 2147483648
    %v194 = vor.u32 1.1754944e-38, %v193
    %v195 = vsel %vm192, %v194, %v190
    %v196 = vmul.f32 1.0, %v195
    %v197 = vld [vmem:[#allocation6] sm:$0xff]
    %v198 = vld [vmem:[#allocation6 + $0x8] sm:$0xff]
    %v199 = vld [vmem:[#allocation6 + $0x10] sm:$0xff]
    %v200 = vld [vmem:[#allocation6 + $0x18] sm:$0xff]
    %v201 = vpack.c.bf16 %v198, %v197
    %v202 = vpack.c.bf16 %v200, %v199
    %v203 = vld [vmem:[%s3] sm:$0x1]
    %v204 = vmul.f32 %v114, %v181
    %v205 = vmul.f32 %v115, %v196
    %v206 = vrot.slane %v204, 4
    %vm207 = vcmask 1047556
    %v208 = vsel %vm207, 0.0, %v206
    %v210 = vunpack.c.l.s4 1983009808
    %v211 = vunpack.c.0.s8 %v210
    %v212 = vperm.slane %v204, %v211
    %v214 = vunpack.c.l.s4 1983009808
    %v215 = vunpack.c.0.s8 %v214
    %v216 = vperm.slane %v208, %v215
    %v217 = vrot.slane %v205, 4
    %v218 = vsel %vm207, 0.0, %v217
    %v220 = vunpack.c.l.s4 1983009808
    %v221 = vunpack.c.0.s8 %v220
    %v222 = vperm.slane %v205, %v221
    %v224 = vunpack.c.l.s4 1983009808
    %v225 = vunpack.c.0.s8 %v224
    %v226 = vperm.slane %v218, %v225
    %v227 = vrot.slane %v222, 4
    %v228 = vsel %vm207, %v227, %v212
    %v229 = vrot.slane %v212, 4
    %v230 = vsel %vm207, %v222, %v229
    %v232 = vunpack.c.l.s4 1934713408
    %v233 = vunpack.c.0.s8 %v232
    %v234 = vperm.slane %v228, %v233
    %v236 = vunpack.c.l.s4 1934713408
    %v237 = vunpack.c.0.s8 %v236
    %v238 = vperm.slane %v230, %v237
    %v239 = vrot.slane %v226, 4
    %v240 = vsel %vm207, %v239, %v216
    %v241 = vrot.slane %v216, 4
    %v242 = vsel %vm207, %v226, %v241
    %v244 = vunpack.c.l.s4 1934713408
    %v245 = vunpack.c.0.s8 %v244
    %v246 = vperm.slane %v240, %v245
    %v248 = vunpack.c.l.s4 1934713408
    %v249 = vunpack.c.0.s8 %v248
    %v250 = vperm.slane %v242, %v249
    %v251 = vrot.slane %v234, 4
    %v252 = vsel %vm207, 0.0, %v251
    %v253 = vrot.slane %v238, 4
    %v254 = vsel %vm207, 0.0, %v253
    %v255 = vrot.slane %v246, 4
    %v256 = vsel %vm207, 0.0, %v255
    %v257 = vrot.slane %v250, 4
    %v258 = vsel %vm207, 0.0, %v257
    %267 = vst [vmem:[#allocation1] ss:$4 sm:$0xff] %v234
    %s268 = scalar_lea.vmem [#allocation1], 1
    %269 = vst [vmem:[%s268] ss:$4 sm:$0xff] %v252
    %s270 = scalar_lea.vmem [#allocation1], 2
    %271 = vst [vmem:[%s270] ss:$4 sm:$0xff] %v238
    %s272 = scalar_lea.vmem [#allocation1], 3
    %273 = vst [vmem:[%s272] ss:$4 sm:$0xff] %v254
    %s274 = scalar_lea.vmem [#allocation1], 32
    %275 = vst [vmem:[%s274] ss:$4 sm:$0xff] %v246
    %s276 = scalar_lea.vmem [#allocation1], 33
    %277 = vst [vmem:[%s276] ss:$4 sm:$0xff] %v256
    %s278 = scalar_lea.vmem [#allocation1], 34
    %279 = vst [vmem:[%s278] ss:$4 sm:$0xff] %v250
    %s280 = scalar_lea.vmem [#allocation1], 35
    %281 = vst [vmem:[%s280] ss:$4 sm:$0xff] %v258
    %v282 = vld.sshfl [vmem:[#allocation1] sm:$0xff pattern:$0x73625140]
    %v283 = vld.sshfl [vmem:[#allocation1 + $0x20] sm:$0xff pattern:$0x73625140]
    %v286 = vpack.c.bf16 %v283, %v282
    %v288 = vperm.slane %v203, 0
    %v291 = vsel %vm90, %v286, 0
    %293 = vmatpush.bf16.msra.mxu0 0
    %294 = vmatpush.bf16.msra.mxu0 0
    %295 = vmatpush.bf16.msra.mxu0 0
    %296 = vmatpush.bf16.msra.mxu0 0
    %297 = vmatpush.bf16.msra.mxu0 0
    %298 = vmatpush.bf16.msra.mxu0 0
    %299 = vmatpush.bf16.msra.mxu0 %v202
    %300 = vmatpush.bf16.msra.mxu0 %v201
    %301 = vmatmul.bf16.gmra.mxu0 %v291
    %v302 = vpop.f32.mrf.mxu0
    %v303 = vadd.f32 %v288, %v302
    %v304 = vpop.f32.mrf.mxu0
    %v305 = vadd.f32 %v288, %v304
    %306 = vdwg.mxu0
    %v309 = vrot.slane %v303, 2
    %v310 = vrot.slane %v303, 4
    %v311 = vrot.slane %v303, 6
    %v312 = vrot.slane %v305, 2
    %v313 = vrot.slane %v305, 4
    %v314 = vrot.slane %v305, 6
    %v321 = vpack.c.bf16 %v303, %v303
    %v322 = vpack.c.bf16 %v309, %v309
    %v323 = vpack.c.bf16 %v310, %v310
    %v324 = vpack.c.bf16 %v311, %v311
    %v325 = vpack.c.bf16 %v305, %v305
    %v326 = vpack.c.bf16 %v312, %v312
    %v327 = vpack.c.bf16 %v313, %v313
    %v328 = vpack.c.bf16 %v314, %v314
    %329 = vst [vmem:[#allocation2] sm:$0x1] %v321
    %330 = vst [vmem:[#allocation2 + $0x1] sm:$0x1] %v322
    %331 = vst [vmem:[#allocation2 + $0x2] sm:$0x1] %v323
    %332 = vst [vmem:[#allocation2 + $0x3] sm:$0x1] %v324
    %333 = vst [vmem:[#allocation2 + $0x4] sm:$0x1] %v325
    %334 = vst [vmem:[#allocation2 + $0x5] sm:$0x1] %v326
    %335 = vst [vmem:[#allocation2 + $0x6] sm:$0x1] %v327
    %336 = vst [vmem:[#allocation2 + $0x7] sm:$0x1] %v328
    %v337 = vld [vmem:[#allocation8] sm:$0xff]
    %v338 = vld [vmem:[#allocation8 + $0x8] sm:$0xff]
    %v339 = vld [vmem:[#allocation8 + $0x10] sm:$0xff]
    %v340 = vld [vmem:[#allocation8 + $0x18] sm:$0xff]
    %v341 = vpack.c.bf16 %v338, %v337
    %v342 = vpack.c.bf16 %v340, %v339
    %v343 = vld [vmem:[#allocation2] sm:$0x1]
    %v345 = vsel %vm90, 0, 0
    %347 = vmatpush.bf16.msra.mxu0 0
    %348 = vmatpush.bf16.msra.mxu0 0
    %349 = vmatpush.bf16.msra.mxu0 0
    %350 = vmatpush.bf16.msra.mxu0 0
    %351 = vmatpush.bf16.msra.mxu0 0
    %352 = vmatpush.bf16.msra.mxu0 0
    %353 = vmatpush.bf16.msra.mxu0 %v342
    %354 = vmatpush.bf16.msra.mxu0 %v341
    %355 = vmatmul.bf16.gmra.mxu0 %v345
    %v356 = vpop.f32.mrf.mxu0
    %v357 = vadd.f32 0.0, %v356
    %v358 = vpop.f32.mrf.mxu0
    %359 = vdwg.mxu0
    %v360 = vunpack.c.l.bf16 %v343
    %v361 = vadd.f32 %v360, %v357
    %v362 = vxor.u32 %v361, 2147483648
    %v363 = vmul.f32 %v362, 1.442695
    %v364 = vpow.pop %v363
    %v365 = vadd.f32 %v364, 1.0
    %v366 = vrcp.pop %v365
    %v367 = vmul.f32 %v365, %v366
    %v368 = vsub.f32 1.0, %v367
    %v369 = vmul.f32 %v366, %v368
    %v370 = vadd.f32 %v366, %v369
    %vm371 = vweird.f32 %v365
    %vm372 = vweird.f32 %v366
    %vm373 = vmor %vm371, %vm372
    %v374 = vsel %vm373, %v366, %v370
    %v375 = vand.u32 2147483647, %v365
    %vm376 = vcmp.eq.f32.partialorder %v375, 8.507059e+37
    %v377 = vand.u32 %v365, 2147483648
    %v378 = vor.u32 1.1754944e-38, %v377
    %v379 = vsel %vm376, %v378, %v374
    %v380 = vmul.f32 1.0, %v379
    %v381 = vtanh.pop %v361
    %v382 = vmul.f32 %v380, 0.0
    %384 = vrot.lane.b32.xlu0 %v381, 32
    %v385 = vpop.permute.xlu0 %384
    %v387 = vmul.f32 %v380, %v385
    %389 = vrot.lane.b32.xlu0 %v387, 32
    %v390 = vpop.permute.xlu0 %389
    %v392 = vadd.f32 %v382, %v390
    %v393 = vtanh.pop %v392
    %395 = vrot.lane.b32.xlu0 %v393, 32
    %v396 = vpop.permute.xlu0 %395
    %v398 = vmul.f32 %v380, %v396
    %s399 = scalar_lea.vmem [#allocation2], 1
    %v400 = vld [vmem:[%s399] sm:$0x1]
    %v401 = vpack.c.bf16 %v398, %v398
    %403 = vrot.lane.b32.xlu0 %v401, 64
    %v404 = vpop.permute.xlu0 %403
    %v406 = vsel %vm90, %v404, 0
    %408 = vmatpush.bf16.msra.mxu0 0
    %409 = vmatpush.bf16.msra.mxu0 0
    %410 = vmatpush.bf16.msra.mxu0 0
    %411 = vmatpush.bf16.msra.mxu0 0
    %412 = vmatpush.bf16.msra.mxu0 0
    %413 = vmatpush.bf16.msra.mxu0 0
    %414 = vmatpush.bf16.msra.mxu0 %v342
    %415 = vmatpush.bf16.msra.mxu0 %v341
    %416 = vmatmul.bf16.gmra.mxu0 %v406
    %v417 = vpop.f32.mrf.mxu0
    %v418 = vadd.f32 0.0, %v417
    %v419 = vpop.f32.mrf.mxu0
    %420 = vdwg.mxu0
    %v421 = vunpack.c.l.bf16 %v400
    %v422 = vadd.f32 %v421, %v418
    %v423 = vxor.u32 %v422, 2147483648
    %v424 = vmul.f32 %v423, 1.442695
    %v425 = vpow.pop %v424
    %v426 = vadd.f32 %v425, 1.0
    %v427 = vrcp.pop %v426
    %v428 = vmul.f32 %v426, %v427
    %v429 = vsub.f32 1.0, %v428
    %v430 = vmul.f32 %v427, %v429
    %v431 = vadd.f32 %v427, %v430
    %vm432 = vweird.f32 %v426
    %vm433 = vweird.f32 %v427
    %vm434 = vmor %vm432, %vm433
    %v435 = vsel %vm434, %v427, %v431
    %v436 = vand.u32 2147483647, %v426
    %vm437 = vcmp.eq.f32.partialorder %v436, 8.507059e+37
    %v438 = vand.u32 %v426, 2147483648
    %v439 = vor.u32 1.1754944e-38, %v438
    %v440 = vsel %vm437, %v439, %v435
    %v441 = vmul.f32 1.0, %v440
    %v442 = vtanh.pop %v422
    %v443 = vmul.f32 %v441, %v392
    %445 = vrot.lane.b32.xlu0 %v442, 32
    %v446 = vpop.permute.xlu0 %445
    %v448 = vmul.f32 %v441, %v446
    %450 = vrot.lane.b32.xlu0 %v448, 32
    %v451 = vpop.permute.xlu0 %450
    %v453 = vadd.f32 %v443, %v451
    %v454 = vtanh.pop %v453
    %456 = vrot.lane.b32.xlu0 %v454, 32
    %v457 = vpop.permute.xlu0 %456
    %v459 = vmul.f32 %v441, %v457
    %s460 = scalar_lea.vmem [#allocation2], 2
    %v461 = vld [vmem:[%s460] sm:$0x1]
    %v462 = vpack.c.bf16 %v459, %v459
    %464 = vrot.lane.b32.xlu0 %v462, 64
    %v465 = vpop.permute.xlu0 %464
    %v467 = vsel %vm90, %v465, 0
    %469 = vmatpush.bf16.msra.mxu0 0
    %470 = vmatpush.bf16.msra.mxu0 0
    %471 = vmatpush.bf16.msra.mxu0 0
    %472 = vmatpush.bf16.msra.mxu0 0
    %473 = vmatpush.bf16.msra.mxu0 0
    %474 = vmatpush.bf16.msra.mxu0 0
    %475 = vmatpush.bf16.msra.mxu0 %v342
    %476 = vmatpush.bf16.msra.mxu0 %v341
    %477 = vmatmul.bf16.gmra.mxu0 %v467
    %v478 = vpop.f32.mrf.mxu0
    %v479 = vadd.f32 0.0, %v478
    %v480 = vpop.f32.mrf.mxu0
    %481 = vdwg.mxu0
    %v482 = vunpack.c.l.bf16 %v461
    %v483 = vadd.f32 %v482, %v479
    %v484 = vxor.u32 %v483, 2147483648
    %v485 = vmul.f32 %v484, 1.442695
    %v486 = vpow.pop %v485
    %v487 = vadd.f32 %v486, 1.0
    %v488 = vrcp.pop %v487
    %v489 = vmul.f32 %v487, %v488
    %v490 = vsub.f32 1.0, %v489
    %v491 = vmul.f32 %v488, %v490
    %v492 = vadd.f32 %v488, %v491
    %vm493 = vweird.f32 %v487
    %vm494 = vweird.f32 %v488
    %vm495 = vmor %vm493, %vm494
    %v496 = vsel %vm495, %v488, %v492
    %v497 = vand.u32 2147483647, %v487
    %vm498 = vcmp.eq.f32.partialorder %v497, 8.507059e+37
    %v499 = vand.u32 %v487, 2147483648
    %v500 = vor.u32 1.1754944e-38, %v499
    %v501 = vsel %vm498, %v500, %v496
    %v502 = vmul.f32 1.0, %v501
    %v503 = vtanh.pop %v483
    %v504 = vmul.f32 %v502, %v453
    %506 = vrot.lane.b32.xlu0 %v503, 32
    %v507 = vpop.permute.xlu0 %506
    %v509 = vmul.f32 %v502, %v507
    %511 = vrot.lane.b32.xlu0 %v509, 32
    %v512 = vpop.permute.xlu0 %511
    %v514 = vadd.f32 %v504, %v512
    %v515 = vtanh.pop %v514
    %517 = vrot.lane.b32.xlu0 %v515, 32
    %v518 = vpop.permute.xlu0 %517
    %v520 = vmul.f32 %v502, %v518
    %s521 = scalar_lea.vmem [#allocation2], 3
    %v522 = vld [vmem:[%s521] sm:$0x1]
    %v523 = vpack.c.bf16 %v520, %v520
    %525 = vrot.lane.b32.xlu0 %v523, 64
    %v526 = vpop.permute.xlu0 %525
    %v528 = vsel %vm90, %v526, 0
    %530 = vmatpush.bf16.msra.mxu0 0
    %531 = vmatpush.bf16.msra.mxu0 0
    %532 = vmatpush.bf16.msra.mxu0 0
    %533 = vmatpush.bf16.msra.mxu0 0
    %534 = vmatpush.bf16.msra.mxu0 0
    %535 = vmatpush.bf16.msra.mxu0 0
    %536 = vmatpush.bf16.msra.mxu0 %v342
    %537 = vmatpush.bf16.msra.mxu0 %v341
    %538 = vmatmul.bf16.gmra.mxu0 %v528
    %v539 = vpop.f32.mrf.mxu0
    %v540 = vadd.f32 0.0, %v539
    %v541 = vpop.f32.mrf.mxu0
    %542 = vdwg.mxu0
    %v543 = vunpack.c.l.bf16 %v522
    %v544 = vadd.f32 %v543, %v540
    %v545 = vxor.u32 %v544, 2147483648
    %v546 = vmul.f32 %v545, 1.442695
    %v547 = vpow.pop %v546
    %v548 = vadd.f32 %v547, 1.0
    %v549 = vrcp.pop %v548
    %v550 = vmul.f32 %v548, %v549
    %v551 = vsub.f32 1.0, %v550
    %v552 = vmul.f32 %v549, %v551
    %v553 = vadd.f32 %v549, %v552
    %vm554 = vweird.f32 %v548
    %vm555 = vweird.f32 %v549
    %vm556 = vmor %vm554, %vm555
    %v557 = vsel %vm556, %v549, %v553
    %v558 = vand.u32 2147483647, %v548
    %vm559 = vcmp.eq.f32.partialorder %v558, 8.507059e+37
    %v560 = vand.u32 %v548, 2147483648
    %v561 = vor.u32 1.1754944e-38, %v560
    %v562 = vsel %vm559, %v561, %v557
    %v563 = vmul.f32 1.0, %v562
    %v564 = vtanh.pop %v544
    %v565 = vmul.f32 %v563, %v514
    %567 = vrot.lane.b32.xlu0 %v564, 32
    %v568 = vpop.permute.xlu0 %567
    %v570 = vmul.f32 %v563, %v568
    %572 = vrot.lane.b32.xlu0 %v570, 32
    %v573 = vpop.permute.xlu0 %572
    %v575 = vadd.f32 %v565, %v573
    %v576 = vtanh.pop %v575
    %578 = vrot.lane.b32.xlu0 %v576, 32
    %v579 = vpop.permute.xlu0 %578
    %v581 = vmul.f32 %v563, %v579
    %s582 = scalar_lea.vmem [#allocation2], 4
    %v583 = vld [vmem:[%s582] sm:$0x1]
    %v584 = vpack.c.bf16 %v581, %v581
    %586 = vrot.lane.b32.xlu0 %v584, 64
    %v587 = vpop.permute.xlu0 %586
    %v589 = vsel %vm90, %v587, 0
    %591 = vmatpush.bf16.msra.mxu0 0
    %592 = vmatpush.bf16.msra.mxu0 0
    %593 = vmatpush.bf16.msra.mxu0 0
    %594 = vmatpush.bf16.msra.mxu0 0
    %595 = vmatpush.bf16.msra.mxu0 0
    %596 = vmatpush.bf16.msra.mxu0 0
    %597 = vmatpush.bf16.msra.mxu0 %v342
    %598 = vmatpush.bf16.msra.mxu0 %v341
    %599 = vmatmul.bf16.gmra.mxu0 %v589
    %v600 = vpop.f32.mrf.mxu0
    %v601 = vadd.f32 0.0, %v600
    %v602 = vpop.f32.mrf.mxu0
    %603 = vdwg.mxu0
    %v604 = vunpack.c.l.bf16 %v583
    %v605 = vadd.f32 %v604, %v601
    %v606 = vxor.u32 %v605, 2147483648
    %v607 = vmul.f32 %v606, 1.442695
    %v608 = vpow.pop %v607
    %v609 = vadd.f32 %v608, 1.0
    %v610 = vrcp.pop %v609
    %v611 = vmul.f32 %v609, %v610
    %v612 = vsub.f32 1.0, %v611
    %v613 = vmul.f32 %v610, %v612
    %v614 = vadd.f32 %v610, %v613
    %vm615 = vweird.f32 %v609
    %vm616 = vweird.f32 %v610
    %vm617 = vmor %vm615, %vm616
    %v618 = vsel %vm617, %v610, %v614
    %v619 = vand.u32 2147483647, %v609
    %vm620 = vcmp.eq.f32.partialorder %v619, 8.507059e+37
    %v621 = vand.u32 %v609, 2147483648
    %v622 = vor.u32 1.1754944e-38, %v621
    %v623 = vsel %vm620, %v622, %v618
    %v624 = vmul.f32 1.0, %v623
    %v625 = vtanh.pop %v605
    %v626 = vmul.f32 %v624, %v575
    %628 = vrot.lane.b32.xlu0 %v625, 32
    %v629 = vpop.permute.xlu0 %628
    %v631 = vmul.f32 %v624, %v629
    %633 = vrot.lane.b32.xlu0 %v631, 32
    %v634 = vpop.permute.xlu0 %633
    %v636 = vadd.f32 %v626, %v634
    %v637 = vtanh.pop %v636
    %639 = vrot.lane.b32.xlu0 %v637, 32
    %v640 = vpop.permute.xlu0 %639
    %v642 = vmul.f32 %v624, %v640
    %s643 = scalar_lea.vmem [#allocation2], 5
    %v644 = vld [vmem:[%s643] sm:$0x1]
    %v645 = vpack.c.bf16 %v642, %v642
    %647 = vrot.lane.b32.xlu0 %v645, 64
    %v648 = vpop.permute.xlu0 %647
    %v650 = vsel %vm90, %v648, 0
    %652 = vmatpush.bf16.msra.mxu0 0
    %653 = vmatpush.bf16.msra.mxu0 0
    %654 = vmatpush.bf16.msra.mxu0 0
    %655 = vmatpush.bf16.msra.mxu0 0
    %656 = vmatpush.bf16.msra.mxu0 0
    %657 = vmatpush.bf16.msra.mxu0 0
    %658 = vmatpush.bf16.msra.mxu0 %v342
    %659 = vmatpush.bf16.msra.mxu0 %v341
    %660 = vmatmul.bf16.gmra.mxu0 %v650
    %v661 = vpop.f32.mrf.mxu0
    %v662 = vadd.f32 0.0, %v661
    %v663 = vpop.f32.mrf.mxu0
    %664 = vdwg.mxu0
    %v665 = vunpack.c.l.bf16 %v644
    %v666 = vadd.f32 %v665, %v662
    %v667 = vxor.u32 %v666, 2147483648
    %v668 = vmul.f32 %v667, 1.442695
    %v669 = vpow.pop %v668
    %v670 = vadd.f32 %v669, 1.0
    %v671 = vrcp.pop %v670
    %v672 = vmul.f32 %v670, %v671
    %v673 = vsub.f32 1.0, %v672
    %v674 = vmul.f32 %v671, %v673
    %v675 = vadd.f32 %v671, %v674
    %vm676 = vweird.f32 %v670
    %vm677 = vweird.f32 %v671
    %vm678 = vmor %vm676, %vm677
    %v679 = vsel %vm678, %v671, %v675
    %v680 = vand.u32 2147483647, %v670
    %vm681 = vcmp.eq.f32.partialorder %v680, 8.507059e+37
    %v682 = vand.u32 %v670, 2147483648
    %v683 = vor.u32 1.1754944e-38, %v682
    %v684 = vsel %vm681, %v683, %v679
    %v685 = vmul.f32 1.0, %v684
    %v686 = vtanh.pop %v666
    %v687 = vmul.f32 %v685, %v636
    %689 = vrot.lane.b32.xlu0 %v686, 32
    %v690 = vpop.permute.xlu0 %689
    %v692 = vmul.f32 %v685, %v690
    %694 = vrot.lane.b32.xlu0 %v692, 32
    %v695 = vpop.permute.xlu0 %694
    %v697 = vadd.f32 %v687, %v695
    %v698 = vtanh.pop %v697
    %700 = vrot.lane.b32.xlu0 %v698, 32
    %v701 = vpop.permute.xlu0 %700
    %v703 = vmul.f32 %v685, %v701
    %s704 = scalar_lea.vmem [#allocation2], 6
    %v705 = vld [vmem:[%s704] sm:$0x1]
    %v706 = vpack.c.bf16 %v703, %v703
    %708 = vrot.lane.b32.xlu0 %v706, 64
    %v709 = vpop.permute.xlu0 %708
    %v711 = vsel %vm90, %v709, 0
    %713 = vmatpush.bf16.msra.mxu0 0
    %714 = vmatpush.bf16.msra.mxu0 0
    %715 = vmatpush.bf16.msra.mxu0 0
    %716 = vmatpush.bf16.msra.mxu0 0
    %717 = vmatpush.bf16.msra.mxu0 0
    %718 = vmatpush.bf16.msra.mxu0 0
    %719 = vmatpush.bf16.msra.mxu0 %v342
    %720 = vmatpush.bf16.msra.mxu0 %v341
    %721 = vmatmul.bf16.gmra.mxu0 %v711
    %v722 = vpop.f32.mrf.mxu0
    %v723 = vadd.f32 0.0, %v722
    %v724 = vpop.f32.mrf.mxu0
    %725 = vdwg.mxu0
    %v726 = vunpack.c.l.bf16 %v705
    %v727 = vadd.f32 %v726, %v723
    %v728 = vxor.u32 %v727, 2147483648
    %v729 = vmul.f32 %v728, 1.442695
    %v730 = vpow.pop %v729
    %v731 = vadd.f32 %v730, 1.0
    %v732 = vrcp.pop %v731
    %v733 = vmul.f32 %v731, %v732
    %v734 = vsub.f32 1.0, %v733
    %v735 = vmul.f32 %v732, %v734
    %v736 = vadd.f32 %v732, %v735
    %vm737 = vweird.f32 %v731
    %vm738 = vweird.f32 %v732
    %vm739 = vmor %vm737, %vm738
    %v740 = vsel %vm739, %v732, %v736
    %v741 = vand.u32 2147483647, %v731
    %vm742 = vcmp.eq.f32.partialorder %v741, 8.507059e+37
    %v743 = vand.u32 %v731, 2147483648
    %v744 = vor.u32 1.1754944e-38, %v743
    %v745 = vsel %vm742, %v744, %v740
    %v746 = vmul.f32 1.0, %v745
    %v747 = vtanh.pop %v727
    %v748 = vmul.f32 %v746, %v697
    %750 = vrot.lane.b32.xlu0 %v747, 32
    %v751 = vpop.permute.xlu0 %750
    %v753 = vmul.f32 %v746, %v751
    %755 = vrot.lane.b32.xlu0 %v753, 32
    %v756 = vpop.permute.xlu0 %755
    %v758 = vadd.f32 %v748, %v756
    %v759 = vtanh.pop %v758
    %761 = vrot.lane.b32.xlu0 %v759, 32
    %v762 = vpop.permute.xlu0 %761
    %v764 = vmul.f32 %v746, %v762
    %s765 = scalar_lea.vmem [#allocation2], 7
    %v766 = vld [vmem:[%s765] sm:$0x1]
    %v767 = vpack.c.bf16 %v764, %v764
    %769 = vrot.lane.b32.xlu0 %v767, 64
    %v770 = vpop.permute.xlu0 %769
    %v772 = vsel %vm90, %v770, 0
    %774 = vmatpush.bf16.msra.mxu0 0
    %775 = vmatpush.bf16.msra.mxu0 0
    %776 = vmatpush.bf16.msra.mxu0 0
    %777 = vmatpush.bf16.msra.mxu0 0
    %778 = vmatpush.bf16.msra.mxu0 0
    %779 = vmatpush.bf16.msra.mxu0 0
    %780 = vmatpush.bf16.msra.mxu0 %v342
    %781 = vmatpush.bf16.msra.mxu0 %v341
    %782 = vmatmul.bf16.gmra.mxu0 %v772
    %v783 = vpop.f32.mrf.mxu0
    %v784 = vadd.f32 0.0, %v783
    %v785 = vpop.f32.mrf.mxu0
    %786 = vdwg.mxu0
    %v787 = vunpack.c.l.bf16 %v766
    %v788 = vadd.f32 %v787, %v784
    %v789 = vxor.u32 %v788, 2147483648
    %v790 = vmul.f32 %v789, 1.442695
    %v791 = vpow.pop %v790
    %v792 = vadd.f32 %v791, 1.0
    %v793 = vrcp.pop %v792
    %v794 = vmul.f32 %v792, %v793
    %v795 = vsub.f32 1.0, %v794
    %v796 = vmul.f32 %v793, %v795
    %v797 = vadd.f32 %v793, %v796
    %vm798 = vweird.f32 %v792
    %vm799 = vweird.f32 %v793
    %vm800 = vmor %vm798, %vm799
    %v801 = vsel %vm800, %v793, %v797
    %v802 = vand.u32 2147483647, %v792
    %vm803 = vcmp.eq.f32.partialorder %v802, 8.507059e+37
    %v804 = vand.u32 %v792, 2147483648
    %v805 = vor.u32 1.1754944e-38, %v804
    %v806 = vsel %vm803, %v805, %v801
    %v807 = vmul.f32 1.0, %v806
    %v808 = vtanh.pop %v788
    %v809 = vmul.f32 %v807, %v758
    %811 = vrot.lane.b32.xlu0 %v808, 32
    %v812 = vpop.permute.xlu0 %811
    %v814 = vmul.f32 %v807, %v812
    %816 = vrot.lane.b32.xlu0 %v814, 32
    %v817 = vpop.permute.xlu0 %816
    %v819 = vadd.f32 %v809, %v817
    %v820 = vtanh.pop %v819
    %822 = vrot.lane.b32.xlu0 %v820, 32
    %v823 = vpop.permute.xlu0 %822
    %v825 = vmul.f32 %v807, %v823
    %v826 = vpack.c.bf16 %v825, %v825
    %v827 = vld [vmem:[#allocation9] sm:$0xff]
    %v828 = vld [vmem:[#allocation9 + $0x8] sm:$0xff]
    %v829 = vld [vmem:[#allocation9 + $0x10] sm:$0xff]
    %v830 = vld [vmem:[#allocation9 + $0x18] sm:$0xff]
    %v831 = vpack.c.bf16 %v828, %v827
    %v832 = vpack.c.bf16 %v830, %v829
    %v833 = vld [vmem:[%s5] sm:$0x1]
    %v835 = vperm.slane %v833, 0
    %838 = vrot.lane.b32.xlu0 %v826, 64
    %v839 = vpop.permute.xlu0 %838
    %v841 = vsel %vm90, %v839, 0
    %843 = vmatpush.bf16.msra.mxu0 0
    %844 = vmatpush.bf16.msra.mxu0 0
    %845 = vmatpush.bf16.msra.mxu0 0
    %846 = vmatpush.bf16.msra.mxu0 0
    %847 = vmatpush.bf16.msra.mxu0 0
    %848 = vmatpush.bf16.msra.mxu0 0
    %849 = vmatpush.bf16.msra.mxu0 %v832
    %850 = vmatpush.bf16.msra.mxu0 %v831
    %851 = vmatmul.bf16.gmra.mxu0 %v841
    %v852 = vpop.f32.mrf.mxu0
    %v853 = vadd.f32 %v835, %v852
    %v854 = vpop.f32.mrf.mxu0
    %855 = vdwg.mxu0
    %856 = vst [vmem:[#allocation11] sm:$0x3] %v853
    // Predicated region
    $region42: #{tpu_custom_call.1} parent=1 // pred_check
      _
    $region43: #{tpu_custom_call.1} parent=1 // pred_check_branch
      %858 = sbr.rel (0) target = $region45
    $region44: #{tpu_custom_call.1} parent=1 // pred_region
      %860 = vsyncadd [#allocation5], 0
      %s862 = sshll.u32 [#allocation11], 4
      %s863 = int_to_ptr.vmem [resolvable:$true] %s862
      %s864 = sshll.u32 %s6, 4
      %s865 = int_to_ptr.hbm [resolvable:$true] %s864
      %867 = dma.vmem_to_hbm [thread:$0]  %s863, 32, %s865, [#allocation5]
    $region45: #{tpu_custom_call.1} parent=1 // pred_fallthru
      _
    // Predicated region
    $region46: #{tpu_custom_call.1} parent=1 // pred_check
      _
    $region47: #{tpu_custom_call.1} parent=1 // pred_check_branch
      %869 = sbr.rel (0) target = $region49
    $region48: #{tpu_custom_call.1} parent=1 // pred_region
      %871 = dma.done [#allocation5], 32
    $region49: #{tpu_custom_call.1} parent=1 // pred_fallthru
      _
    %872 = vsyncpa [#allocation4], 1
    %873 = vsyncpa [#allocation7], 1
    %874 = vsyncpa [#allocation10], 1
    %875 = vsyncpa [#allocation5], 1

</llo_original>
